<compile_context>
chip_gen: v6e
topology: v6e:2x2x1
jax: 0.10.0
libtpu: 0.0.40
codegen_flags: <defaults>
</compile_context>

<pallas_src>
import functools

import jax
import jax.numpy as jnp
from jax.experimental import pallas as pl
from jax.experimental.pallas import tpu as pltpu


def _norm_kernel(x_ref, g_ref, b_ref, o_ref, *, epsilon):
    # x_ref: (tile_rows, n_state) block in VMEM; g_ref/b_ref: (1, n_state)
    x = x_ref[...].astype(jnp.float32)
    u = jnp.mean(x, axis=-1, keepdims=True)
    xc = x - u
    s = jnp.mean(xc * xc, axis=-1, keepdims=True)
    inv = jax.lax.rsqrt(s + epsilon)                    # (tile_rows, 1), EUP
    g = g_ref[...].astype(jnp.float32)                  # (1, n_state)
    b = b_ref[...].astype(jnp.float32)                  # (1, n_state)
    # Fold gamma into the inverse std; single scaled write-out.
    o_ref[...] = (xc * (inv * g) + b).astype(o_ref.dtype)


def _sublane_multiple(dtype):
    # f32 -> 8, bf16 -> 16, int8/fp8 -> 32 (sub-32-bit dtypes pack sublanes).
    itemsize = jnp.dtype(dtype).itemsize
    return max(8, 32 // itemsize)


def _physical_vmem_bytes():
    """Per-TensorCore VMEM capacity; conservative fallback if query fails."""
    try:
        return int(pltpu.get_tpu_info().vmem_capacity_bytes)
    except Exception:
        return 64 * 1024 * 1024  # v7x per-TC size: safe on every generation


def _per_row_bytes(n_state, dtype):
    """Pipeline footprint per tile row.

    4x = in + out blocks, each double-buffered, at the I/O dtype.
    12x = ~3 live f32 temporaries inside the body (x upcast, x-u, pre-cast
    result) so bf16/int8 inputs don't under-budget the scoped VMEM limit.
    """
    itemsize = jnp.dtype(dtype).itemsize
    return 4 * n_state * itemsize + 12 * n_state


def _pick_tile_rows(rows, n_state, dtype, vmem_budget_bytes):
    """Largest sublane-aligned row tile whose pipeline footprint fits budget.

    No hard row cap: tiles grow until the budget binds or the per-block size
    hits the ~8 MiB roofline plateau (blocks >= ~1 MiB already sit at 85%+
    of HBM bandwidth; bigger buys nothing but VMEM pressure).
    """
    itemsize = jnp.dtype(dtype).itemsize
    per_row = _per_row_bytes(n_state, dtype)
    mult = _sublane_multiple(dtype)

    tr_budget = vmem_budget_bytes // per_row
    tr_plateau = (8 * 1024 * 1024) // max(1, n_state * itemsize)
    tr = min(int(tr_budget), int(tr_plateau), 8192)
    tr = max(mult, (tr // mult) * mult)

    # Don't allocate a block taller than the (sublane-rounded) row count.
    rows_rounded = -(-rows // mult) * mult
    return min(tr, rows_rounded)


def norm(x, g, b, epsilon=1e-5, tile_rows=None):
    """LayerNorm over the last axis, matching the PyTorch Norm module.

    x: (..., n_state); g, b: (n_state,)
    """
    orig_shape = x.shape
    n_state = orig_shape[-1]
    rows = 1
    for d in orig_shape[:-1]:
        rows *= d

    x2 = x.reshape(rows, n_state)          # view for contiguous input
    g2 = g.reshape(1, n_state)
    b2 = b.reshape(1, n_state)

    # Generation-aware budgets (see module docstring).
    phys_vmem = _physical_vmem_bytes()
    tile_budget = min(phys_vmem * 3 // 8, 48 * 1024 * 1024)   # 48 MiB v5e/v6e, 24 MiB v7x

    if tile_rows is None:
        tile_rows = _pick_tile_rows(rows, n_state, x.dtype, tile_budget)
    num_blocks = -(-rows // tile_rows)     # ceil-div; no host-side padding

    # Scoped-VMEM limit: actual pipeline footprint + headroom, never more
    # than 3/4 of physical VMEM (keeps v7x's 64 MiB/TC safe, and lifts
    # v5e's 16 MiB / v6e's 32 MiB scoped defaults when needed).
    footprint = tile_rows * _per_row_bytes(n_state, x.dtype) + 8 * n_state * 4
    vmem_limit = min(phys_vmem * 3 // 4, footprint + 16 * 1024 * 1024)
    vmem_limit = max(vmem_limit, 16 * 1024 * 1024)

    kernel = functools.partial(_norm_kernel, epsilon=epsilon)

    itemsize = jnp.dtype(x.dtype).itemsize
    cost = pl.CostEstimate(
        flops=7 * rows * n_state,
        transcendentals=rows,
        bytes_accessed=2 * rows * n_state * itemsize
        + 2 * n_state * jnp.dtype(g.dtype).itemsize,
    )

    out = pl.pallas_call(
        kernel,
        out_shape=jax.ShapeDtypeStruct((rows, n_state), x.dtype),
        grid_spec=pltpu.PrefetchScalarGridSpec(
            num_scalar_prefetch=0,
            grid=(num_blocks,),
            in_specs=[
                pl.BlockSpec((tile_rows, n_state), lambda i: (i, 0)),
                pl.BlockSpec((1, n_state), lambda i: (0, 0)),
                pl.BlockSpec((1, n_state), lambda i: (0, 0)),
            ],
            out_specs=pl.BlockSpec((tile_rows, n_state), lambda i: (i, 0)),
        ),
        compiler_params=pltpu.CompilerParams(
            dimension_semantics=("parallel",),
            vmem_limit_bytes=int(vmem_limit),
        ),
        cost_estimate=cost,
    )(x2, g2, b2)

    return out.reshape(orig_shape)


def _reference(x, g, b, epsilon):
    u = jnp.mean(x, axis=-1, keepdims=True)
    s = jnp.mean((x - u) ** 2, axis=-1, keepdims=True)
    return (x - u) / jnp.sqrt(s + epsilon) * g + b


if __name__ == "__main__":
    key = jax.random.PRNGKey(0)

    # Lane-dense last dim (multiple of 128) to avoid masked partial stores.
    batch, seq, n_state = 2, 8, 128
    x = jax.random.normal(key, (batch, seq, n_state), dtype=jnp.float32)
    # Parameters matching nn.Parameter(torch.ones/zeros(n_state))
    g = jnp.ones((n_state,), dtype=jnp.float32)
    b = jnp.zeros((n_state,), dtype=jnp.float32)

    y = norm(x, g, b, epsilon=1e-5)
    jax.block_until_ready(y)
    ref = _reference(x, g, b, 1e-5)
    assert jnp.allclose(y, ref, atol=1e-5, rtol=1e-5), "mismatch vs reference"

    # Also exercise the no-pad partial-tail-block path (rows not a multiple
    # of tile_rows): 3*7 = 21 rows with an explicit 8-row tile.
    x2 = jax.random.normal(jax.random.PRNGKey(1), (3, 7, n_state),
                           dtype=jnp.float32)
    y2 = norm(x2, g, b, epsilon=1e-5, tile_rows=8)
    jax.block_until_ready(y2)
    ref2 = _reference(x2, g, b, 1e-5)
    assert jnp.allclose(y2, ref2, atol=1e-5, rtol=1e-5), "tail-block mismatch"

    # Non-default dtype path (bf16 I/O with f32 accumulation in-kernel).
    x3 = jax.random.normal(jax.random.PRNGKey(2), (4, 16, n_state),
                           dtype=jnp.bfloat16)
    y3 = norm(x3, g.astype(jnp.bfloat16), b.astype(jnp.bfloat16), epsilon=1e-5)
    jax.block_until_ready(y3)
    ref3 = _reference(x3.astype(jnp.float32), g, b, 1e-5)
    assert jnp.allclose(y3.astype(jnp.float32), ref3, atol=2e-2, rtol=2e-2), \
        "bf16 mismatch"

    print("KERNEL_OK")
</pallas_src>

<mosaic_0001>
module attributes {stable_mosaic.version = 11 : i64} {
  func.func @_norm_kernel(%arg0: i32, %arg1: memref<16x128xf32, #tpu.memory_space<vmem>>, %arg2: memref<1x128xf32, #tpu.memory_space<vmem>>, %arg3: memref<1x128xf32, #tpu.memory_space<vmem>>, %arg4: memref<16x128xf32, #tpu.memory_space<vmem>>) attributes {dimension_semantics = [#tpu.dimension_semantics<parallel>], iteration_bounds = array<i64: 1>, scalar_prefetch = 0 : i64, scratch_operands = 0 : i64, tpu.core_type = #tpu.core_type<tc>, window_params = [{transform_indices = @transform_0, window_bounds = array<i64: 16, 128>}, {pipeline_mode = #tpu.pipeline_mode<synchronous>, transform_indices = @transform_1, window_bounds = array<i64: 1, 128>}, {pipeline_mode = #tpu.pipeline_mode<synchronous>, transform_indices = @transform_2, window_bounds = array<i64: 1, 128>}, {transform_indices = @transform_3, window_bounds = array<i64: 16, 128>}]} {
    %c0 = arith.constant 0 : index
    %c0_0 = arith.constant 0 : index
    %0 = vector.load %arg1[%c0, %c0_0] : memref<16x128xf32, #tpu.memory_space<vmem>>, vector<16x128xf32>
    %cst = arith.constant dense<0.000000e+00> : vector<16xf32>
    %1 = vector.multi_reduction <add>, %0, %cst [1] : vector<16x128xf32> to vector<16xf32>
    %2 = vector.shape_cast %1 : vector<16xf32> to vector<16x1xf32>
    %cst_1 = arith.constant 1.280000e+02 : f32
    %3 = vector.broadcast %cst_1 : f32 to vector<16x1xf32>
    %4 = arith.divf %2, %3 : vector<16x1xf32>
    %5 = vector.broadcast %4 : vector<16x1xf32> to vector<16x128xf32>
    %6 = arith.subf %0, %5 : vector<16x128xf32>
    %7 = arith.mulf %6, %6 : vector<16x128xf32>
    %cst_2 = arith.constant dense<0.000000e+00> : vector<16xf32>
    %8 = vector.multi_reduction <add>, %7, %cst_2 [1] : vector<16x128xf32> to vector<16xf32>
    %9 = vector.shape_cast %8 : vector<16xf32> to vector<16x1xf32>
    %cst_3 = arith.constant 1.280000e+02 : f32
    %10 = vector.broadcast %cst_3 : f32 to vector<16x1xf32>
    %11 = arith.divf %9, %10 : vector<16x1xf32>
    %cst_4 = arith.constant 9.99999974E-6 : f32
    %12 = vector.broadcast %cst_4 : f32 to vector<16x1xf32>
    %13 = arith.addf %11, %12 : vector<16x1xf32>
    %14 = math.rsqrt %13 : vector<16x1xf32>
    %c0_5 = arith.constant 0 : index
    %c0_6 = arith.constant 0 : index
    %15 = vector.load %arg2[%c0_5, %c0_6] : memref<1x128xf32, #tpu.memory_space<vmem>>, vector<1x128xf32>
    %c0_7 = arith.constant 0 : index
    %c0_8 = arith.constant 0 : index
    %16 = vector.load %arg3[%c0_7, %c0_8] : memref<1x128xf32, #tpu.memory_space<vmem>>, vector<1x128xf32>
    %17 = vector.broadcast %14 : vector<16x1xf32> to vector<16x128xf32>
    %18 = vector.broadcast %15 : vector<1x128xf32> to vector<16x128xf32>
    %19 = arith.mulf %17, %18 : vector<16x128xf32>
    %20 = arith.mulf %6, %19 : vector<16x128xf32>
    %21 = vector.broadcast %16 : vector<1x128xf32> to vector<16x128xf32>
    %22 = arith.addf %20, %21 : vector<16x128xf32>
    %c0_9 = arith.constant 0 : index
    %c0_10 = arith.constant 0 : index
    %23 = vector.load %arg4[%c0_9, %c0_10] : memref<16x128xf32, #tpu.memory_space<vmem>>, vector<16x128xf32>
    tpu.vector_store %arg4[%c0_9, %c0_10], %22 {strides = array<i32>} : memref<16x128xf32, #tpu.memory_space<vmem>>, vector<16x128xf32>,
    return
  }
  func.func @transform_0(%arg0: i32) -> (i32, i32) {
    %c0_i32 = arith.constant 0 : i32
    %c0_i32_0 = arith.constant 0 : i32
    return %arg0, %c0_i32 : i32, i32
  }
  func.func @transform_1(%arg0: i32) -> (i32, i32) {
    %c0_i32 = arith.constant 0 : i32
    %c0_i32_0 = arith.constant 0 : i32
    %c0_i32_1 = arith.constant 0 : i32
    return %c0_i32, %c0_i32_0 : i32, i32
  }
  func.func @transform_2(%arg0: i32) -> (i32, i32) {
    %c0_i32 = arith.constant 0 : i32
    %c0_i32_0 = arith.constant 0 : i32
    %c0_i32_1 = arith.constant 0 : i32
    return %c0_i32, %c0_i32_0 : i32, i32
  }
  func.func @transform_3(%arg0: i32) -> (i32, i32) {
    %c0_i32 = arith.constant 0 : i32
    %c0_i32_0 = arith.constant 0 : i32
    return %arg0, %c0_i32 : i32, i32
  }
}

</mosaic_0001>

<llo_original>
// kernel: tpu_custom_call.1
$region0: #{tpu_custom_call.1}
  #allocation0 [shape = 'u32[]', space=smem, size = 0x4, offset = 0x4, fixed_abs, tag = 'smem constant byte address 0x4 - core index']
  #allocation1 [shape = 'u32[144,128]{1,0:T(1,128)}', space=vmem, size = 0x12000, scoped, tag = 'internal scratch']
  %s0 = inlined_call_operand.hbm [shape: f32[16,128], index: 0, kind: input, shape index: {}]
  %s1 = inlined_call_operand.vmem [shape: f32[1,128], index: 1, kind: input, shape index: {}]
  %s2 = inlined_call_operand.vmem [shape: f32[1,128], index: 2, kind: input, shape index: {}]
  %s3 = inlined_call_operand.hbm [shape: f32[16,128], index: 3, kind: output, shape index: {}]
  %s4 = sld [smem:[#allocation0]]
  $region26: #{tpu_custom_call.1} parent=0
    _
  %s6 = ssub.s32 1, %s4
  %s7 = scalar_select 0, %s6, %s4
  $region1: #{tpu_custom_call.1} parent=0
    #allocation2 [shape = 'u8[8192]{0}', space=vmem, size = 0x2000, scoped, tag = 'input window, operand 0, single buffered']
    #allocation3 [shape = 's32[1]{0}', space=sflag, size = 0x4, scoped, tag = 'scoped memory for tpu_custom_call.1']
    #allocation4 [shape = 's32[1]{0}', space=sflag, size = 0x4, scoped, tag = 'scoped memory for tpu_custom_call.1']
    #allocation5 [shape = 'u8[8192]{0}', space=vmem, size = 0x2000, scoped, tag = 'output window, operand 0, single buffered']
    %8 = vsyncpa [#allocation3], 0
    %9 = vsyncpa [#allocation4], 0
    // Predicated region
    $region2: #{tpu_custom_call.1} parent=1 // pred_check
      _
    $region3: #{tpu_custom_call.1} parent=1 // pred_check_branch
      %11 = sbr.rel (0) target = $region5
    $region4: #{tpu_custom_call.1} parent=1 // pred_region
      %s13 = ssub.s32 256, 256
      %14 = vsyncadd [#allocation3], %s13
      %s15 = sshll.u32 [#allocation2], 4
      %s16 = int_to_ptr.vmem [resolvable:$true] %s15
      %21 = dma.hbm_to_vmem [thread:$0]  %s0, 256, %s16, [#allocation3], 128, 128, 8
    $region5: #{tpu_custom_call.1} parent=1 // pred_fallthru
      _
    // Predicated region
    $region6: #{tpu_custom_call.1} parent=1 // pred_check
      _
    $region7: #{tpu_custom_call.1} parent=1 // pred_check_branch
      %23 = sbr.rel (0) target = $region9
    $region8: #{tpu_custom_call.1} parent=1 // pred_region
      _
    $region9: #{tpu_custom_call.1} parent=1 // pred_fallthru
      _
    // Predicated region
    $region10: #{tpu_custom_call.1} parent=1 // pred_check
      _
    $region11: #{tpu_custom_call.1} parent=1 // pred_check_branch
      %25 = sbr.rel (0) target = $region13
    $region12: #{tpu_custom_call.1} parent=1 // pred_region
      _
    $region13: #{tpu_custom_call.1} parent=1 // pred_fallthru
      _
    // Predicated region
    $region14: #{tpu_custom_call.1} parent=1 // pred_check
      _
    $region15: #{tpu_custom_call.1} parent=1 // pred_check_branch
      %27 = sbr.rel (0) target = $region17
    $region16: #{tpu_custom_call.1} parent=1 // pred_region
      %28 = dma.done [#allocation3], 256
    $region17: #{tpu_custom_call.1} parent=1 // pred_fallthru
      _
    %v29 = vld [vmem:[#allocation2] sm:$0xff]
    %v30 = vld [vmem:[#allocation2 + $0x8] sm:$0xff]
    %31 = vadd.xlane.f32.xlu0 %v29
    %v32 = vpop.xlane.xlu0 %31
    %33 = vadd.xlane.f32.xlu0 %v30
    %v34 = vpop.xlane.xlu0 %33
    %v35 = vrcp.pop 128.0
    %v36 = vmul.f32 %v32, %v35
    %v37 = vmul.f32 %v34, %v35
    %v38 = vsub.f32 %v29, %v36
    %v39 = vsub.f32 %v30, %v37
    %v40 = vmul.f32 %v38, %v38
    %v41 = vmul.f32 %v39, %v39
    %42 = vadd.xlane.f32.xlu0 %v40
    %v43 = vpop.xlane.xlu0 %42
    %44 = vadd.xlane.f32.xlu0 %v41
    %v45 = vpop.xlane.xlu0 %44
    %v46 = vmul.f32 %v43, %v35
    %v47 = vmul.f32 %v45, %v35
    %v48 = vadd.f32 %v46, 1e-05
    %v49 = vadd.f32 %v47, 1e-05
    %v50 = vrsqrt.pop %v48
    %v51 = vrsqrt.pop %v49
    %v52 = vld [vmem:[%s1] sm:$0x1]
    %v53 = vld [vmem:[%s2] sm:$0x1]
    %v55 = vlaneseq
    %v56 = vshrl.u32 %v55, 7
    %v57 = vsub.s32 0, %v56
    %v58 = vrot.slane %v52, %v57
    %v60 = vmul.f32 %v50, %v58
    %v61 = vmul.f32 %v51, %v58
    %v62 = vmul.f32 %v38, %v60
    %v63 = vmul.f32 %v39, %v61
    %v65 = vlaneseq
    %v66 = vshrl.u32 %v65, 7
    %v67 = vsub.s32 0, %v66
    %v68 = vrot.slane %v53, %v67
    %v70 = vadd.f32 %v62, %v68
    %v71 = vadd.f32 %v63, %v68
    %72 = vst [vmem:[#allocation5] sm:$0xff] %v70
    %73 = vst [vmem:[#allocation5 + $0x8] sm:$0xff] %v71
    // Predicated region
    $region18: #{tpu_custom_call.1} parent=1 // pred_check
      _
    $region19: #{tpu_custom_call.1} parent=1 // pred_check_branch
      %75 = sbr.rel (0) target = $region21
    $region20: #{tpu_custom_call.1} parent=1 // pred_region
      %s77 = ssub.s32 256, 256
      %78 = vsyncadd [#allocation4], %s77
      %s79 = sshll.u32 [#allocation5], 4
      %s80 = int_to_ptr.vmem [resolvable:$true] %s79
      %85 = dma.vmem_to_hbm [thread:$0]  %s80, 256, %s3, [#allocation4], 128, 128, 8
    $region21: #{tpu_custom_call.1} parent=1 // pred_fallthru
      _
    // Predicated region
    $region22: #{tpu_custom_call.1} parent=1 // pred_check
      _
    $region23: #{tpu_custom_call.1} parent=1 // pred_check_branch
      %87 = sbr.rel (0) target = $region25
    $region24: #{tpu_custom_call.1} parent=1 // pred_region
      %88 = dma.done [#allocation4], 256
    $region25: #{tpu_custom_call.1} parent=1 // pred_fallthru
      _
    %89 = vsyncpa [#allocation3], 1
    %90 = vsyncpa [#allocation4], 1

</llo_original>
